<compile_context>
chip_gen: v7x
topology: tpu7x:2x2x1
jax: 0.10.0
libtpu: 0.0.40
codegen_flags: <defaults>
</compile_context>

<pallas_src>
import jax
import jax.numpy as jnp
from jax.experimental import pallas as pl
from jax.experimental.pallas import tpu as pltpu

LANES = 128            # lane width (last dim of every vreg)
SUBLANES = 8           # sublane alignment (second-to-last dim)
MAX_TILE_ROWS = 2048   # (2048, 128) f32 = 1 MiB per input block
MIN_TILE_ROWS = 256    # below this, per-grid-step overhead starts to dominate


def _mse_partial_kernel(x_ref, y_ref, out_ref, acc_ref):
    """Per-core partial sum of (x - y)^2 over this core's row range.

    x_ref / y_ref : (tile_rows, LANES) VMEM tiles (native input dtype)
    out_ref       : (1, 1) SMEM partial-sum slot for this core
    acc_ref       : (tile_rows, LANES) f32 VMEM accumulator (lives across j)
    """
    j = pl.program_id(1)

    @pl.when(j == 0)
    def _():
        acc_ref[...] = jnp.zeros_like(acc_ref)

    d = x_ref[...].astype(jnp.float32) - y_ref[...].astype(jnp.float32)
    acc_ref[...] += d * d          # pure VPU; no cross-lane work in the hot loop

    @pl.when(j == pl.num_programs(1) - 1)
    def _():
        # Single cross-lane/sublane reduction per core, epilogue only.
        out_ref[0, 0] = jnp.sum(acc_ref[...])


def _choose_tiling(n: int):
    """Return (tile_rows, num_blocks, padded_size).

    padded_size == n means the copy-free path (no zero-padding in the wrapper).
    """
    if n % LANES == 0:
        rows = n // LANES
        # Single block equal to the full array: exempt from the (8,128) rule.
        if rows <= MAX_TILE_ROWS:
            return rows, 1, n
        if rows % SUBLANES == 0:
            # Largest sublane-aligned divisor of `rows` that fits in a 1 MiB tile.
            t = MAX_TILE_ROWS
            while t >= MIN_TILE_ROWS:
                if rows % t == 0:
                    return t, rows // t, n
                t -= SUBLANES
    # Fall back: zero-pad up to a whole number of (<= max-size) tiles.
    rows = -(-n // LANES)
    rows = -(-rows // SUBLANES) * SUBLANES
    tile_rows = min(MAX_TILE_ROWS, rows)
    num_blocks = -(-rows // tile_rows)
    return tile_rows, num_blocks, num_blocks * tile_rows * LANES


def mse_loss(outputs: jax.Array, targets: jax.Array) -> jax.Array:
    assert outputs.shape == targets.shape
    out_dtype = jnp.result_type(outputs.dtype, targets.dtype)
    n = outputs.size
    x = outputs.reshape(-1)        # native dtype; cast to f32 inside the kernel
    y = targets.reshape(-1)

    tile_rows, num_blocks, n_pad = _choose_tiling(n)
    if n_pad != n:
        # Zero padding contributes 0 to the sum; we divide by the true n below.
        # Only ragged (non-lane-aligned / prime-ish) sizes take this copy.
        x = jnp.zeros((n_pad,), x.dtype).at[:n].set(x)
        y = jnp.zeros((n_pad,), y.dtype).at[:n].set(y)

    x = x.reshape(num_blocks * tile_rows, LANES)
    y = y.reshape(num_blocks * tile_rows, LANES)

    # Split the block range across 2 TensorCores (v7x megacore) when it divides
    # evenly; on single-TC chips (v5e/v6e) the parallel axis just iterates.
    ncores = 2 if (num_blocks >= 2 and num_blocks % 2 == 0) else 1
    blocks_per_core = num_blocks // ncores

    partials = pl.pallas_call(
        _mse_partial_kernel,
        out_shape=jax.ShapeDtypeStruct((ncores, 1), jnp.float32),
        grid_spec=pltpu.PrefetchScalarGridSpec(
            num_scalar_prefetch=0,
            grid=(ncores, blocks_per_core),
            in_specs=[
                pl.BlockSpec((tile_rows, LANES),
                             lambda c, j: (c * blocks_per_core + j, 0)),
                pl.BlockSpec((tile_rows, LANES),
                             lambda c, j: (c * blocks_per_core + j, 0)),
            ],
            out_specs=pl.BlockSpec((1, 1), lambda c, j: (c, 0),
                                   memory_space=pltpu.SMEM),
            scratch_shapes=[pltpu.VMEM((tile_rows, LANES), jnp.float32)],
        ),
        compiler_params=pltpu.CompilerParams(
            dimension_semantics=("parallel", "arbitrary"),
        ),
    )(x, y)

    return (jnp.sum(partials) / jnp.float32(n)).astype(out_dtype)


if __name__ == "__main__":
    key = jax.random.PRNGKey(0)
    k1, k2 = jax.random.split(key)
    outputs = jax.random.normal(k1, (2, 4, 16, 16), dtype=jnp.float32)
    targets = jax.random.normal(k2, (2, 4, 16, 16), dtype=jnp.float32)

    loss = mse_loss(outputs, targets)
    jax.block_until_ready(loss)

    ref = jnp.mean((outputs - targets) ** 2)
    assert jnp.allclose(loss, ref, rtol=1e-5, atol=1e-6), (loss, ref)
    print("KERNEL_OK")
</pallas_src>

<mosaic_0001>
module attributes {stable_mosaic.version = 11 : i64} {
  func.func @_mse_partial_kernel(%arg0: i32, %arg1: i32, %arg2: memref<16x128xf32, #tpu.memory_space<vmem>>, %arg3: memref<16x128xf32, #tpu.memory_space<vmem>>, %arg4: memref<1x1xf32, #tpu.memory_space<smem>>, %arg5: memref<16x128xf32, #tpu.memory_space<vmem>>) attributes {dimension_semantics = [#tpu.dimension_semantics<parallel>, #tpu.dimension_semantics<arbitrary>], iteration_bounds = array<i64: 1, 1>, scalar_prefetch = 0 : i64, scratch_operands = 1 : i64, tpu.core_type = #tpu.core_type<tc>, window_params = [{transform_indices = @transform_0, window_bounds = array<i64: 16, 128>}, {transform_indices = @transform_1, window_bounds = array<i64: 16, 128>}, {transform_indices = @transform_2, window_bounds = array<i64: 1, 1>}]} {
    %c0_i32 = arith.constant 0 : i32
    %0 = arith.cmpi eq, %arg1, %c0_i32 : i32
    %1 = arith.extui %0 : i1 to i32
    %c0_i32_0 = arith.constant 0 : i32
    %2 = arith.cmpi ne, %1, %c0_i32_0 : i32
    scf.if %2 {
      %cst = arith.constant 0.000000e+00 : f32
      %13 = vector.broadcast %cst : f32 to vector<16x128xf32>
      %c0_10 = arith.constant 0 : index
      %c0_11 = arith.constant 0 : index
      %14 = vector.load %arg5[%c0_10, %c0_11] : memref<16x128xf32, #tpu.memory_space<vmem>>, vector<16x128xf32>
      tpu.vector_store %arg5[%c0_10, %c0_11], %13 {strides = array<i32>} : memref<16x128xf32, #tpu.memory_space<vmem>>, vector<16x128xf32>,
    } else {
    }
    %c0 = arith.constant 0 : index
    %c0_1 = arith.constant 0 : index
    %3 = vector.load %arg2[%c0, %c0_1] : memref<16x128xf32, #tpu.memory_space<vmem>>, vector<16x128xf32>
    %c0_2 = arith.constant 0 : index
    %c0_3 = arith.constant 0 : index
    %4 = vector.load %arg3[%c0_2, %c0_3] : memref<16x128xf32, #tpu.memory_space<vmem>>, vector<16x128xf32>
    %5 = arith.subf %3, %4 : vector<16x128xf32>
    %c0_4 = arith.constant 0 : index
    %c0_5 = arith.constant 0 : index
    %6 = vector.load %arg5[%c0_4, %c0_5] : memref<16x128xf32, #tpu.memory_space<vmem>>, vector<16x128xf32>
    %7 = arith.mulf %5, %5 : vector<16x128xf32>
    %8 = arith.addf %6, %7 : vector<16x128xf32>
    %c0_6 = arith.constant 0 : index
    %c0_7 = arith.constant 0 : index
    %9 = vector.load %arg5[%c0_6, %c0_7] : memref<16x128xf32, #tpu.memory_space<vmem>>, vector<16x128xf32>
    tpu.vector_store %arg5[%c0_6, %c0_7], %8 {strides = array<i32>} : memref<16x128xf32, #tpu.memory_space<vmem>>, vector<16x128xf32>,
    %c0_i32_8 = arith.constant 0 : i32
    %10 = arith.cmpi eq, %arg1, %c0_i32_8 : i32
    %11 = arith.extui %10 : i1 to i32
    %c0_i32_9 = arith.constant 0 : i32
    %12 = arith.cmpi ne, %11, %c0_i32_9 : i32
    scf.if %12 {
      %c0_10 = arith.constant 0 : index
      %c0_11 = arith.constant 0 : index
      %13 = vector.load %arg5[%c0_10, %c0_11] : memref<16x128xf32, #tpu.memory_space<vmem>>, vector<16x128xf32>
      %14 = vector.shape_cast %13 : vector<16x128xf32> to vector<1x16x128xf32>
      %cst = arith.constant dense<0.000000e+00> : vector<1xf32>
      %15 = vector.multi_reduction <add>, %14, %cst [1, 2] : vector<1x16x128xf32> to vector<1xf32>
      %16 = vector.shape_cast %15 : vector<1xf32> to vector<1x1x1xf32>
      %17 = vector.extract %16[0, 0, 0] : f32 from vector<1x1x1xf32>
      %c0_12 = arith.constant 0 : index
      %c0_13 = arith.constant 0 : index
      %18 = memref.load %arg4[%c0_12, %c0_13] : memref<1x1xf32, #tpu.memory_space<smem>>
      memref.store %17, %arg4[%c0_12, %c0_13] : memref<1x1xf32, #tpu.memory_space<smem>>
    } else {
    }
    return
  }
  func.func @transform_0(%arg0: i32, %arg1: i32) -> (i32, i32) {
    %c1_i32 = arith.constant 1 : i32
    %0 = arith.muli %arg0, %c1_i32 : i32
    %1 = arith.addi %0, %arg1 : i32
    %c0_i32 = arith.constant 0 : i32
    %c0_i32_0 = arith.constant 0 : i32
    return %1, %c0_i32 : i32, i32
  }
  func.func @transform_1(%arg0: i32, %arg1: i32) -> (i32, i32) {
    %c1_i32 = arith.constant 1 : i32
    %0 = arith.muli %arg0, %c1_i32 : i32
    %1 = arith.addi %0, %arg1 : i32
    %c0_i32 = arith.constant 0 : i32
    %c0_i32_0 = arith.constant 0 : i32
    return %1, %c0_i32 : i32, i32
  }
  func.func @transform_2(%arg0: i32, %arg1: i32) -> (i32, i32) {
    %c0_i32 = arith.constant 0 : i32
    %c0_i32_0 = arith.constant 0 : i32
    return %arg0, %c0_i32 : i32, i32
  }
}

</mosaic_0001>

<llo_original>
// kernel: tpu_custom_call.1
$region0: #{tpu_custom_call.1}
  #allocation0 [shape = 'u32[]', space=smem, size = 0x4, offset = 0x4, fixed_abs, tag = 'smem constant byte address 0x4 - core index']
  #allocation1 [shape = 'u32[144,128]{1,0:T(1,128)}', space=vmem, size = 0x12000, scoped, tag = 'internal scratch']
  #allocation2 [shape = 'f32[16,128]{1,0:T(8,128)}', space=vmem, size = 0x2000, scoped, tag = 'scratch operand']
  %s0 = inlined_call_operand.hbm [shape: f32[16,128], index: 0, kind: input, shape index: {}]
  %s1 = inlined_call_operand.hbm [shape: f32[16,128], index: 1, kind: input, shape index: {}]
  %s2 = inlined_call_operand.hbm [shape: f32[1,1], index: 2, kind: output, shape index: {}]
  %s3 = sld [smem:[#allocation0]]
  $region34: #{tpu_custom_call.1} parent=0
    _
  %s5 = ssub.s32 1, %s3
  %s6 = scalar_select 0, %s5, %s3
  $region1: #{tpu_custom_call.1} parent=0
    #allocation3 [shape = 'u8[8192]{0}', space=vmem, size = 0x2000, scoped, tag = 'input window, operand 0, single buffered']
    #allocation4 [shape = 's32[1]{0}', space=sflag, size = 0x4, scoped, tag = 'scoped memory for tpu_custom_call.1']
    #allocation5 [shape = 's32[1]{0}', space=sflag, size = 0x4, scoped, tag = 'scoped memory for tpu_custom_call.1']
    #allocation6 [shape = 'u8[8192]{0}', space=vmem, size = 0x2000, scoped, tag = 'input window, operand 1, single buffered']
    #allocation7 [shape = 's32[1]{0}', space=sflag, size = 0x4, scoped, tag = 'scoped memory for tpu_custom_call.1']
    #allocation8 [shape = 'u8[512]{0}', space=smem, size = 0x200, scoped, tag = 'output window, operand 0, single buffered']
    %7 = vsyncpa [#allocation4], 0
    %8 = vsyncpa [#allocation7], 0
    %9 = vsyncpa [#allocation5], 0
    // Predicated region
    $region2: #{tpu_custom_call.1} parent=1 // pred_check
      _
    $region3: #{tpu_custom_call.1} parent=1 // pred_check_branch
      %11 = sbr.rel (0) target = $region5
    $region4: #{tpu_custom_call.1} parent=1 // pred_region
      %s12 = sadd.s32 0, 0
      %s13 = smul.u32 2, %s12
      %s15 = ssub.s32 256, 256
      %16 = vsyncadd [#allocation4], %s15
      %s17 = smul.addr %s13, 128
      %s18 = scalar_lea.hbm %s0, %s17
      %s19 = sshll.u32 [#allocation3], 4
      %s20 = int_to_ptr.vmem [resolvable:$true] %s19
      %25 = dma.hbm_to_vmem [thread:$0]  %s18, 256, %s20, [#allocation4], 128, 128, 8
    $region5: #{tpu_custom_call.1} parent=1 // pred_fallthru
      _
    // Predicated region
    $region6: #{tpu_custom_call.1} parent=1 // pred_check
      _
    $region7: #{tpu_custom_call.1} parent=1 // pred_check_branch
      %27 = sbr.rel (0) target = $region9
    $region8: #{tpu_custom_call.1} parent=1 // pred_region
      %s28 = sadd.s32 0, 0
      %s29 = smul.u32 2, %s28
      %s31 = ssub.s32 256, 256
      %32 = vsyncadd [#allocation7], %s31
      %s33 = smul.addr %s29, 128
      %s34 = scalar_lea.hbm %s1, %s33
      %s35 = sshll.u32 [#allocation6], 4
      %s36 = int_to_ptr.vmem [resolvable:$true] %s35
      %41 = dma.hbm_to_vmem [thread:$0]  %s34, 256, %s36, [#allocation7], 128, 128, 8
    $region9: #{tpu_custom_call.1} parent=1 // pred_fallthru
      _
    // Predicated region
    $region10: #{tpu_custom_call.1} parent=1 // pred_check
      _
    $region11: #{tpu_custom_call.1} parent=1 // pred_check_branch
      %43 = sbr.rel (0) target = $region13
    $region12: #{tpu_custom_call.1} parent=1 // pred_region
      %44 = dma.done [#allocation4], 256
    $region13: #{tpu_custom_call.1} parent=1 // pred_fallthru
      _
    // Predicated region
    $region14: #{tpu_custom_call.1} parent=1 // pred_check
      _
    $region15: #{tpu_custom_call.1} parent=1 // pred_check_branch
      %46 = sbr.rel (0) target = $region17
    $region16: #{tpu_custom_call.1} parent=1 // pred_region
      %47 = dma.done [#allocation7], 256
    $region17: #{tpu_custom_call.1} parent=1 // pred_fallthru
      _
    %s48 = sadd.s32 0, 0
    %s49 = smul.u32 2, %s48
    %s50 = sadd.s32 0, 0
    %s51 = smul.u32 2, %s50
    %p52 = scmp.eq.s32.totalorder 0, 0
    // Predicated region
    $region18: #{tpu_custom_call.1} parent=1 // pred_check
      %p53 = pneg %p52
    $region19: #{tpu_custom_call.1} parent=1 // pred_check_branch
      %55 = sbr.rel (%p53) target = $region21
    $region20: #{tpu_custom_call.1} parent=1 // pred_region
      %56 = vst [vmem:[#allocation2] sm:$0xff] 0.0
      %57 = vst [vmem:[#allocation2 + $0x8] sm:$0xff] 0.0
    $region21: #{tpu_custom_call.1} parent=1 // pred_fallthru
      _
    %v58 = vld [vmem:[#allocation3] sm:$0xff]
    %v59 = vld [vmem:[#allocation3 + $0x8] sm:$0xff]
    %v60 = vld [vmem:[#allocation6] sm:$0xff]
    %v61 = vld [vmem:[#allocation6 + $0x8] sm:$0xff]
    %v62 = vsub.f32 %v58, %v60
    %v63 = vsub.f32 %v59, %v61
    %v64 = vld [vmem:[#allocation2] sm:$0xff]
    %v65 = vld [vmem:[#allocation2 + $0x8] sm:$0xff]
    %v66 = vmul.f32 %v62, %v62
    %v67 = vmul.f32 %v63, %v63
    %v68 = vadd.f32 %v64, %v66
    %v69 = vadd.f32 %v65, %v67
    %70 = vst [vmem:[#allocation2] sm:$0xff] %v68
    %71 = vst [vmem:[#allocation2 + $0x8] sm:$0xff] %v69
    // Predicated region
    $region22: #{tpu_custom_call.1} parent=1 // pred_check
      %p72 = pneg %p52
    $region23: #{tpu_custom_call.1} parent=1 // pred_check_branch
      %74 = sbr.rel (%p72) target = $region25
    $region24: #{tpu_custom_call.1} parent=1 // pred_region
      %v75 = vld [vmem:[#allocation2] sm:$0xff]
      %v76 = vld [vmem:[#allocation2 + $0x8] sm:$0xff]
      %v77 = vadd.f32 %v75, %v76
      %78 = vadd.xlane.f32.xlu0 %v77
      %v79 = vpop.xlane.xlu0 %78
      %v80 = vrot.slane %v79, 4
      %v81 = vadd.f32 %v79, %v80
      %v82 = vrot.slane %v81, 2
      %v83 = vadd.f32 %v81, %v82
      %v84 = vrot.slane %v83, 1
      %v85 = vadd.f32 %v83, %v84
      %s86 = vtos %v85
      %s87 = scalar_lea.smem [#allocation8], 0
      %88 = sst [smem:[%s87]] %s86
    $region25: #{tpu_custom_call.1} parent=1 // pred_fallthru
      _
    // Predicated region
    $region26: #{tpu_custom_call.1} parent=1 // pred_check
      _
    $region27: #{tpu_custom_call.1} parent=1 // pred_check_branch
      %90 = sbr.rel (0) target = $region29
    $region28: #{tpu_custom_call.1} parent=1 // pred_region
      %s92 = ssub.s32 16, 16
      %93 = vsyncadd [#allocation5], %s92
      %96 = dma.smem_to_hbm [#allocation8], 16, %s2, [#allocation5]
    $region29: #{tpu_custom_call.1} parent=1 // pred_fallthru
      _
    // Predicated region
    $region30: #{tpu_custom_call.1} parent=1 // pred_check
      _
    $region31: #{tpu_custom_call.1} parent=1 // pred_check_branch
      %98 = sbr.rel (0) target = $region33
    $region32: #{tpu_custom_call.1} parent=1 // pred_region
      %99 = dma.done [#allocation5], 16
    $region33: #{tpu_custom_call.1} parent=1 // pred_fallthru
      _
    %100 = sfence
    %101 = vsyncpa [#allocation4], 1
    %102 = vsyncpa [#allocation7], 1
    %103 = vsyncpa [#allocation5], 1

</llo_original>
